<compile_context>
chip_gen: v7x
topology: tpu7x:2x2x1
jax: 0.10.0
libtpu: 0.0.40
codegen_flags: <defaults>
</compile_context>

<pallas_src>
import math

import jax
import jax.numpy as jnp
from jax.experimental import pallas as pl
from jax.experimental.pallas import tpu as pltpu


def _round_up(n, m):
    return ((n + m - 1) // m) * m


# -----------------------------------------------------------------------------
# Kernel: one batch tile of   relu(x@W1 + b1) @ W2  +  x@W3  +  (b2 + b3)
# -----------------------------------------------------------------------------
def _linear_layer_kernel(x_ref, w13_ref, b1_ref, w2_ref, bo_ref, o_ref):
    fo = w2_ref.shape[0]                              # padded out width

    # x arrives f32; cast to bf16 in-kernel (VPU, hidden under the MXU) so the
    # wrapper never writes + re-reads a bf16 copy of x through HBM.
    x = x_ref[...].astype(w13_ref.dtype)              # (TB, Fi) bf16

    # Fused first stage: one MXU pass against the [W1 | W3] slab, f32 accum.
    hs = jnp.dot(x, w13_ref[...], preferred_element_type=jnp.float32)
    h = jnp.maximum(hs[:, :fo] + b1_ref[...], 0.0)    # block: Linear + ReLU
    s = hs[:, fo:]                                    # skip:  x @ W3

    # TODO(synk): Dropout layers are eval-mode identity here; training-mode
    # dropout would use pltpu.prng_seed + pltpu.stateful_bernoulli.
    y = jnp.dot(h.astype(w2_ref.dtype), w2_ref[...],
                preferred_element_type=jnp.float32)
    o_ref[...] = (y + s + bo_ref[...]).astype(o_ref.dtype)


# -----------------------------------------------------------------------------
# One-time weight packing (call at init / param update, NOT every forward).
# -----------------------------------------------------------------------------
def pack_params(params):
    w1, b1, w2, b2, w3, b3 = (params["w1"], params["b1"], params["w2"],
                              params["b2"], params["w3"], params["b3"])
    F_in, F_out = w1.shape
    Fi = _round_up(F_in, 8)      # sublane-aligned contraction dim
    Fo = _round_up(F_out, 128)   # lane-dense output dim
    # TODO(synk): pad Fo to 256 on v6e/v7x (2x256 MXU) for large F_out.

    def pad2(a, r, c):
        return jnp.pad(a, ((0, r - a.shape[0]), (0, c - a.shape[1])))

    wdt = jnp.bfloat16
    # TODO(synk): on v7x, fp8 weights (+ per-channel scales) would halve
    # resident VMEM / HBM traffic; needs accuracy validation.
    return {
        "w13": jnp.concatenate([pad2(w1, Fi, Fo), pad2(w3, Fi, Fo)],
                               axis=1).astype(wdt),          # (Fi, 2*Fo)
        "w2": pad2(w2, Fo, Fo).astype(wdt),                  # (Fo, Fo)
        "b1": pad2(b1, 1, Fo).astype(jnp.float32),           # (1, Fo)
        "bo": pad2(b2 + b3, 1, Fo).astype(jnp.float32),      # (1, Fo) pre-summed
        "F_in": int(F_in), "F_out": int(F_out), "Fi": int(Fi), "Fo": int(Fo),
    }


# -----------------------------------------------------------------------------
# Forward
# -----------------------------------------------------------------------------
def linear_layer_forward(x, packed, *, tb=512):
    """x: (B, in_features) float32.  packed: output of pack_params()."""
    B, F_in = x.shape
    assert F_in == packed["F_in"], "x feature dim does not match packed params"
    Fi, Fo, F_out = packed["Fi"], packed["Fo"], packed["F_out"]
    w13, w2, b1, bo = packed["w13"], packed["w2"], packed["b1"], packed["bo"]

    # ---- per-chip VMEM ceiling: ~85% of capacity leaves headroom for Mosaic
    # internal scratch (v7x: ~54 MiB of 64; v5e/v6e: ~108 MiB of 128). ----
    try:
        vmem_cap = int(pltpu.get_tpu_info().vmem_capacity_bytes)
    except Exception:
        vmem_cap = 64 << 20          # conservative (v7x-sized) fallback
    ceiling = int(vmem_cap * 0.85)

    wbytes = (w13.size + w2.size) * 2 + (b1.size + bo.size) * 4

    def budget(t):
        # Weights counted x2 (covers the double-buffered fallback path),
        # double-buffered f32 x / out tiles, plus in-kernel temporaries
        # (bf16 x copy, f32 hs, bf16 h, f32 y) and fixed headroom.
        tiles = 2 * t * Fi * 4 + 2 * t * Fo * 4
        temps = t * Fi * 2 + t * 2 * Fo * 4 + t * Fo * 2 + t * Fo * 4
        return 2 * wbytes + tiles + temps + (4 << 20)

    # ---- batch-tile selection ----
    tb = max(16, _round_up(min(tb, _round_up(B, 16)), 16))
    # v7x megacore: keep >= 2 grid steps so both TensorCores get work.
    while _round_up(B, tb) // tb < 2 and tb > 16:
        tb = max(16, _round_up(tb // 2, 16))
    # Shrink until the VMEM budget fits under the ceiling.
    while budget(tb) > ceiling and tb > 16:
        tb = max(16, _round_up(tb // 2, 16))
    # TODO(synk): if the resident slabs alone (Fi*2Fo + Fo*Fo bf16) approach
    # the ceiling, add a K grid axis over Fi ("arbitrary", last) with a VMEM
    # f32 accumulator and pl.when init/finalize.

    Bp = _round_up(B, tb)
    xp = x if (Bp == B and Fi == F_in) else \
        jnp.pad(x, ((0, Bp - B), (0, Fi - F_in)))    # f32; only when needed

    vmem_limit = int(min(max(budget(tb), 32 << 20), ceiling))
    grid = (Bp // tb,)

    def run(single_buffer_weights):
        def wspec(shape):
            # Constant index_map -> fetched once; Buffered(1) drops the
            # pointless second buffer and halves resident-weight VMEM.
            if single_buffer_weights:
                return pl.BlockSpec(shape, lambda i: (0, 0),
                                    pipeline_mode=pl.Buffered(1))
            return pl.BlockSpec(shape, lambda i: (0, 0))

        return pl.pallas_call(
            _linear_layer_kernel,
            # TODO(synk): emit bf16 output here if downstream accepts it
            # (halves writeback bytes; biggest win on v5e).
            out_shape=jax.ShapeDtypeStruct((Bp, Fo), x.dtype),
            grid=grid,
            in_specs=[
                pl.BlockSpec((tb, Fi), lambda i: (i, 0)),    # x batch tile (f32)
                wspec((Fi, 2 * Fo)),                         # [W1 | W3] resident
                wspec((1, Fo)),                              # b1
                wspec((Fo, Fo)),                             # W2 resident
                wspec((1, Fo)),                              # b2 + b3
            ],
            out_specs=pl.BlockSpec((tb, Fo), lambda i: (i, 0)),
            compiler_params=pltpu.CompilerParams(
                dimension_semantics=("parallel",),
                vmem_limit_bytes=vmem_limit),
        )(xp, w13, b1, w2, bo)

    try:
        out = run(True)      # single-buffered resident weights
    except Exception:
        out = run(False)     # fallback: default (double) buffering

    return out[:B, :F_out]


# -----------------------------------------------------------------------------
# Init / reference
# -----------------------------------------------------------------------------
def init_params(key, in_features, out_features):
    """Deterministic init mimicking torch.nn.Linear: U(-1/sqrt(fan_in), +)."""
    ks = jax.random.split(key, 6)

    def uni(k, shape, fan_in):
        bound = 1.0 / math.sqrt(fan_in)
        return jax.random.uniform(k, shape, jnp.float32, -bound, bound)

    return {
        # stored as (in, out) == torch weight (out, in) transposed
        "w1": uni(ks[0], (in_features, out_features), in_features),
        "b1": uni(ks[1], (1, out_features), in_features),
        "w2": uni(ks[2], (out_features, out_features), out_features),
        "b2": uni(ks[3], (1, out_features), out_features),
        "w3": uni(ks[4], (in_features, out_features), in_features),
        "b3": uni(ks[5], (1, out_features), in_features),
    }


def reference_forward(x, p):
    """Pure-JAX f32 reference for correctness checking."""
    h = jnp.maximum(x @ p["w1"] + p["b1"], 0.0)
    y = h @ p["w2"] + p["b2"]
    s = x @ p["w3"] + p["b3"]
    return y + s


if __name__ == "__main__":
    key = jax.random.PRNGKey(0)
    k_x, k_p = jax.random.split(key)

    batch, in_features, out_features = 64, 32, 32
    drop_prob = 0.1  # unused in eval-mode forward

    x = jax.random.normal(k_x, (batch, in_features), jnp.float32)
    params = init_params(k_p, in_features, out_features)
    packed = pack_params(params)          # one-time packing, not per call

    out = jax.block_until_ready(linear_layer_forward(x, packed))

    ref = reference_forward(x, params)
    assert out.shape == (batch, out_features)
    # bf16 MXU inputs (incl. the x@W3 skip path) with f32 accumulation ->
    # loose tolerance vs the f32 reference; degrades slowly with large F_in.
    assert jnp.allclose(out, ref, atol=5e-2, rtol=5e-2), "mismatch vs reference"

    print("KERNEL_OK")
</pallas_src>

<mosaic_0001>
module attributes {stable_mosaic.version = 11 : i64} {
  func.func @_linear_layer_kernel(%arg0: i32, %arg1: memref<32x32xf32, #tpu.memory_space<vmem>>, %arg2: memref<32x256xbf16, #tpu.memory_space<vmem>>, %arg3: memref<1x128xf32, #tpu.memory_space<vmem>>, %arg4: memref<128x128xbf16, #tpu.memory_space<vmem>>, %arg5: memref<1x128xf32, #tpu.memory_space<vmem>>, %arg6: memref<32x128xf32, #tpu.memory_space<vmem>>) attributes {dimension_semantics = [#tpu.dimension_semantics<parallel>], iteration_bounds = array<i64: 2>, scalar_prefetch = 0 : i64, scratch_operands = 0 : i64, tpu.core_type = #tpu.core_type<tc>, window_params = [{transform_indices = @transform_0, window_bounds = array<i64: 32, 32>}, {pipeline_mode = #tpu.pipeline_mode<synchronous>, transform_indices = @transform_1, window_bounds = array<i64: 32, 256>}, {pipeline_mode = #tpu.pipeline_mode<synchronous>, transform_indices = @transform_2, window_bounds = array<i64: 1, 128>}, {pipeline_mode = #tpu.pipeline_mode<synchronous>, transform_indices = @transform_3, window_bounds = array<i64: 128, 128>}, {pipeline_mode = #tpu.pipeline_mode<synchronous>, transform_indices = @transform_4, window_bounds = array<i64: 1, 128>}, {transform_indices = @transform_5, window_bounds = array<i64: 32, 128>}]} {
    %c0 = arith.constant 0 : index
    %c0_0 = arith.constant 0 : index
    %0 = vector.load %arg1[%c0, %c0_0] : memref<32x32xf32, #tpu.memory_space<vmem>>, vector<32x32xf32>
    %1 = arith.truncf %0 : vector<32x32xf32> to vector<32x32xbf16>
    %c0_1 = arith.constant 0 : index
    %c0_2 = arith.constant 0 : index
    %2 = vector.load %arg2[%c0_1, %c0_2] : memref<32x256xbf16, #tpu.memory_space<vmem>>, vector<32x256xbf16>
    %cst = arith.constant dense<0.000000e+00> : vector<32x256xf32>
    %3 = tpu.matmul %1, %2, %cst {dimension_numbers = #tpu.dot_dimension_numbers<[1], [0], [0], [1], [0, 0, 1, 1], [], []>} : vector<32x32xbf16>, vector<32x256xbf16>, vector<32x256xf32> -> vector<32x256xf32>
    %4 = vector.extract_strided_slice %3 {offsets = [0, 0], sizes = [32, 128], strides = [1, 1]} : vector<32x256xf32> to vector<32x128xf32>
    %c0_3 = arith.constant 0 : index
    %c0_4 = arith.constant 0 : index
    %5 = vector.load %arg3[%c0_3, %c0_4] : memref<1x128xf32, #tpu.memory_space<vmem>>, vector<1x128xf32>
    %6 = vector.broadcast %5 : vector<1x128xf32> to vector<32x128xf32>
    %7 = arith.addf %4, %6 : vector<32x128xf32>
    %cst_5 = arith.constant 0.000000e+00 : f32
    %8 = vector.broadcast %cst_5 : f32 to vector<32x128xf32>
    %9 = arith.maximumf %7, %8 : vector<32x128xf32>
    %10 = vector.extract_strided_slice %3 {offsets = [0, 128], sizes = [32, 128], strides = [1, 1]} : vector<32x256xf32> to vector<32x128xf32>
    %11 = arith.truncf %9 : vector<32x128xf32> to vector<32x128xbf16>
    %c0_6 = arith.constant 0 : index
    %c0_7 = arith.constant 0 : index
    %12 = vector.load %arg4[%c0_6, %c0_7] : memref<128x128xbf16, #tpu.memory_space<vmem>>, vector<128x128xbf16>
    %cst_8 = arith.constant dense<0.000000e+00> : vector<32x128xf32>
    %13 = tpu.matmul %11, %12, %cst_8 {dimension_numbers = #tpu.dot_dimension_numbers<[1], [0], [0], [1], [0, 0, 1, 1], [], []>} : vector<32x128xbf16>, vector<128x128xbf16>, vector<32x128xf32> -> vector<32x128xf32>
    %14 = arith.addf %13, %10 : vector<32x128xf32>
    %c0_9 = arith.constant 0 : index
    %c0_10 = arith.constant 0 : index
    %15 = vector.load %arg5[%c0_9, %c0_10] : memref<1x128xf32, #tpu.memory_space<vmem>>, vector<1x128xf32>
    %16 = vector.broadcast %15 : vector<1x128xf32> to vector<32x128xf32>
    %17 = arith.addf %14, %16 : vector<32x128xf32>
    %c0_11 = arith.constant 0 : index
    %c0_12 = arith.constant 0 : index
    %18 = vector.load %arg6[%c0_11, %c0_12] : memref<32x128xf32, #tpu.memory_space<vmem>>, vector<32x128xf32>
    tpu.vector_store %arg6[%c0_11, %c0_12], %17 {strides = array<i32>} : memref<32x128xf32, #tpu.memory_space<vmem>>, vector<32x128xf32>,
    return
  }
  func.func @transform_0(%arg0: i32) -> (i32, i32) {
    %c0_i32 = arith.constant 0 : i32
    %c0_i32_0 = arith.constant 0 : i32
    return %arg0, %c0_i32 : i32, i32
  }
  func.func @transform_1(%arg0: i32) -> (i32, i32) {
    %c0_i32 = arith.constant 0 : i32
    %c0_i32_0 = arith.constant 0 : i32
    %c0_i32_1 = arith.constant 0 : i32
    return %c0_i32, %c0_i32_0 : i32, i32
  }
  func.func @transform_2(%arg0: i32) -> (i32, i32) {
    %c0_i32 = arith.constant 0 : i32
    %c0_i32_0 = arith.constant 0 : i32
    %c0_i32_1 = arith.constant 0 : i32
    return %c0_i32, %c0_i32_0 : i32, i32
  }
  func.func @transform_3(%arg0: i32) -> (i32, i32) {
    %c0_i32 = arith.constant 0 : i32
    %c0_i32_0 = arith.constant 0 : i32
    %c0_i32_1 = arith.constant 0 : i32
    return %c0_i32, %c0_i32_0 : i32, i32
  }
  func.func @transform_4(%arg0: i32) -> (i32, i32) {
    %c0_i32 = arith.constant 0 : i32
    %c0_i32_0 = arith.constant 0 : i32
    %c0_i32_1 = arith.constant 0 : i32
    return %c0_i32, %c0_i32_0 : i32, i32
  }
  func.func @transform_5(%arg0: i32) -> (i32, i32) {
    %c0_i32 = arith.constant 0 : i32
    %c0_i32_0 = arith.constant 0 : i32
    return %arg0, %c0_i32 : i32, i32
  }
}

module attributes {stable_mosaic.version = 11 : i64} {
  func.func @_linear_layer_kernel(%arg0: i32, %arg1: memref<32x32xf32, #tpu.memory_space<vmem>>, %arg2: memref<32x256xbf16, #tpu.memory_space<vmem>>, %arg3: memref<1x128xf32, #tpu.memory_space<vmem>>, %arg4: memref<128x128xbf16, #tpu.memory_space<vmem>>, %arg5: memref<1x128xf32, #tpu.memory_space<vmem>>, %arg6: memref<32x128xf32, #tpu.memory_space<vmem>>) attributes {dimension_semantics = [#tpu.dimension_semantics<parallel>], iteration_bounds = array<i64: 2>, scalar_prefetch = 0 : i64, scratch_operands = 0 : i64, tpu.core_type = #tpu.core_type<tc>, window_params = [{transform_indices = @transform_0, window_bounds = array<i64: 32, 32>}, {pipeline_mode = #tpu.pipeline_mode<synchronous>, transform_indices = @transform_1, window_bounds = array<i64: 32, 256>}, {pipeline_mode = #tpu.pipeline_mode<synchronous>, transform_indices = @transform_2, window_bounds = array<i64: 1, 128>}, {pipeline_mode = #tpu.pipeline_mode<synchronous>, transform_indices = @transform_3, window_bounds = array<i64: 128, 128>}, {pipeline_mode = #tpu.pipeline_mode<synchronous>, transform_indices = @transform_4, window_bounds = array<i64: 1, 128>}, {transform_indices = @transform_5, window_bounds = array<i64: 32, 128>}]} {
    %c0 = arith.constant 0 : index
    %c0_0 = arith.constant 0 : index
    %0 = vector.load %arg1[%c0, %c0_0] : memref<32x32xf32, #tpu.memory_space<vmem>>, vector<32x32xf32>
    %1 = arith.truncf %0 : vector<32x32xf32> to vector<32x32xbf16>
    %c0_1 = arith.constant 0 : index
    %c0_2 = arith.constant 0 : index
    %2 = vector.load %arg2[%c0_1, %c0_2] : memref<32x256xbf16, #tpu.memory_space<vmem>>, vector<32x256xbf16>
    %cst = arith.constant dense<0.000000e+00> : vector<32x256xf32>
    %3 = tpu.matmul %1, %2, %cst {dimension_numbers = #tpu.dot_dimension_numbers<[1], [0], [0], [1], [0, 0, 1, 1], [], []>} : vector<32x32xbf16>, vector<32x256xbf16>, vector<32x256xf32> -> vector<32x256xf32>
    %4 = vector.extract_strided_slice %3 {offsets = [0, 0], sizes = [32, 128], strides = [1, 1]} : vector<32x256xf32> to vector<32x128xf32>
    %c0_3 = arith.constant 0 : index
    %c0_4 = arith.constant 0 : index
    %5 = vector.load %arg3[%c0_3, %c0_4] : memref<1x128xf32, #tpu.memory_space<vmem>>, vector<1x128xf32>
    %6 = vector.broadcast %5 : vector<1x128xf32> to vector<32x128xf32>
    %7 = arith.addf %4, %6 : vector<32x128xf32>
    %cst_5 = arith.constant 0.000000e+00 : f32
    %8 = vector.broadcast %cst_5 : f32 to vector<32x128xf32>
    %9 = arith.maximumf %7, %8 : vector<32x128xf32>
    %10 = vector.extract_strided_slice %3 {offsets = [0, 128], sizes = [32, 128], strides = [1, 1]} : vector<32x256xf32> to vector<32x128xf32>
    %11 = arith.truncf %9 : vector<32x128xf32> to vector<32x128xbf16>
    %c0_6 = arith.constant 0 : index
    %c0_7 = arith.constant 0 : index
    %12 = vector.load %arg4[%c0_6, %c0_7] : memref<128x128xbf16, #tpu.memory_space<vmem>>, vector<128x128xbf16>
    %cst_8 = arith.constant dense<0.000000e+00> : vector<32x128xf32>
    %13 = tpu.matmul %11, %12, %cst_8 {dimension_numbers = #tpu.dot_dimension_numbers<[1], [0], [0], [1], [0, 0, 1, 1], [], []>} : vector<32x128xbf16>, vector<128x128xbf16>, vector<32x128xf32> -> vector<32x128xf32>
    %14 = arith.addf %13, %10 : vector<32x128xf32>
    %c0_9 = arith.constant 0 : index
    %c0_10 = arith.constant 0 : index
    %15 = vector.load %arg5[%c0_9, %c0_10] : memref<1x128xf32, #tpu.memory_space<vmem>>, vector<1x128xf32>
    %16 = vector.broadcast %15 : vector<1x128xf32> to vector<32x128xf32>
    %17 = arith.addf %14, %16 : vector<32x128xf32>
    %c0_11 = arith.constant 0 : index
    %c0_12 = arith.constant 0 : index
    %18 = vector.load %arg6[%c0_11, %c0_12] : memref<32x128xf32, #tpu.memory_space<vmem>>, vector<32x128xf32>
    tpu.vector_store %arg6[%c0_11, %c0_12], %17 {strides = array<i32>} : memref<32x128xf32, #tpu.memory_space<vmem>>, vector<32x128xf32>,
    return
  }
  func.func @transform_0(%arg0: i32) -> (i32, i32) {
    %c0_i32 = arith.constant 0 : i32
    %c0_i32_0 = arith.constant 0 : i32
    return %arg0, %c0_i32 : i32, i32
  }
  func.func @transform_1(%arg0: i32) -> (i32, i32) {
    %c0_i32 = arith.constant 0 : i32
    %c0_i32_0 = arith.constant 0 : i32
    %c0_i32_1 = arith.constant 0 : i32
    return %c0_i32, %c0_i32_0 : i32, i32
  }
  func.func @transform_2(%arg0: i32) -> (i32, i32) {
    %c0_i32 = arith.constant 0 : i32
    %c0_i32_0 = arith.constant 0 : i32
    %c0_i32_1 = arith.constant 0 : i32
    return %c0_i32, %c0_i32_0 : i32, i32
  }
  func.func @transform_3(%arg0: i32) -> (i32, i32) {
    %c0_i32 = arith.constant 0 : i32
    %c0_i32_0 = arith.constant 0 : i32
    %c0_i32_1 = arith.constant 0 : i32
    return %c0_i32, %c0_i32_0 : i32, i32
  }
  func.func @transform_4(%arg0: i32) -> (i32, i32) {
    %c0_i32 = arith.constant 0 : i32
    %c0_i32_0 = arith.constant 0 : i32
    %c0_i32_1 = arith.constant 0 : i32
    return %c0_i32, %c0_i32_0 : i32, i32
  }
  func.func @transform_5(%arg0: i32) -> (i32, i32) {
    %c0_i32 = arith.constant 0 : i32
    %c0_i32_0 = arith.constant 0 : i32
    return %arg0, %c0_i32 : i32, i32
  }
}

</mosaic_0001>

<llo_original>
// kernel: tpu_custom_call.1
$region0: #{tpu_custom_call.1}
  #allocation0 [shape = 'u32[]', space=smem, size = 0x4, offset = 0x4, fixed_abs, tag = 'smem constant byte address 0x4 - core index']
  #allocation1 [shape = 'u32[144,128]{1,0:T(1,128)}', space=vmem, size = 0x12000, scoped, tag = 'internal scratch']
  %s0 = inlined_call_operand.vmem [shape: f32[64,32], index: 0, kind: input, shape index: {}]
  %s1 = inlined_call_operand.vmem [shape: bf16[32,256], index: 1, kind: input, shape index: {}]
  %s2 = inlined_call_operand.vmem [shape: f32[1,128], index: 2, kind: input, shape index: {}]
  %s3 = inlined_call_operand.vmem [shape: bf16[128,128], index: 3, kind: input, shape index: {}]
  %s4 = inlined_call_operand.vmem [shape: f32[1,128], index: 4, kind: input, shape index: {}]
  %s5 = inlined_call_operand.hbm [shape: f32[64,128], index: 5, kind: output, shape index: {}]
  %s6 = sld [smem:[#allocation0]]
  $region53: #{tpu_custom_call.1} parent=0
    _
  %s8 = ssub.s32 1, %s6
  %s9 = scalar_select 0, %s8, %s6
  $region1: #{tpu_custom_call.1} parent=0
    #allocation2 [shape = 'u8[32768]{0}', space=vmem, size = 0x8000, scoped, tag = 'output window, operand 0']
    #allocation3 [shape = 's32[2]{0}', space=sflag, size = 0x8, scoped, tag = 'scoped memory for tpu_custom_call.1']
    %10 = vsyncpa [#allocation3], 0
    %s11 = scalar_lea.sflag [#allocation3], 1
    %12 = vsyncpa %s11, 0
    loop: start=0, step=1, limit=4
    $region2: #{tpu_custom_call.1} parent=1 // loop_pre_header
      _
    $region3: #{tpu_custom_call.1} parent=1 // loop_header
      %s14 = sphi 0, %s18
      %p15 = scmp.ge.s32.totalorder %s14, 4
      %s24 = sphi 0, %s26
      %s27 = sphi 0, %s24
      %s28 = sphi 0, %s27
      %s44 = sphi 0, %s28
      %s48 = sphi 0, %s48
      %s50 = sphi 0, %s48
      %s51 = sphi 0, %s50
      %s65 = sphi 0, %s51
      %s69 = sphi 0, %s69
      %s71 = sphi 0, %s69
      %s72 = sphi 0, %s71
      %s86 = sphi 0, %s72
      %s90 = sphi 0, %s90
      %s92 = sphi 0, %s90
      %s93 = sphi 0, %s92
      %s107 = sphi 0, %s93
      %s111 = sphi 0, %s111
      %s113 = sphi 0, %s111
      %s114 = sphi 0, %s113
      %s128 = sphi 0, %s114
      %s134 = sphi 0, %s136
      %s137 = sphi 0, %s134
      %s138 = sphi 0, %s137
      %s154 = sphi 0, %s138
    $region4: #{tpu_custom_call.1} parent=1 // loop_header_branch
      %17 = sbr.rel (%p15) target = $region8
    $region5: #{tpu_custom_call.1} parent=1 // loop_body
      %s19 = ssub.s32 %s14, 1
      %s20 = ssub.s32 %s14, 2
      %s21 = sadd.s32 %s14, 1
      %s22 = ssub.s32 %s14, %s21
      %p23 = scmp.eq.s32.totalorder %s22, 0
      %s25 = sadd.s32 %s24, 1
      %s26 = scalar_select %p23, %s24, %s25
      %p29 = pneg %p23
      %p30 = scmp.eq.s32.totalorder %s14, 1
      %p31 = por %p29, %p30
      %p32 = scmp.ne.s32.totalorder %s24, %s27
      %p33 = scmp.eq.s32.totalorder %s14, 0
      %p34 = por %p32, %p33
      %p35 = scmp.ne.s32.totalorder %s24, %s27
      %p36 = scmp.eq.s32.totalorder %s19, 1
      %p37 = por %p35, %p36
      %p38 = scmp.ne.s32.totalorder %s27, %s28
      %p39 = scmp.eq.s32.totalorder %s19, 0
      %p40 = por %p38, %p39
      %p41 = scmp.ne.s32.totalorder %s27, %s28
      %p42 = scmp.eq.s32.totalorder %s20, 1
      %p43 = por %p41, %p42
      %p45 = scmp.ne.s32.totalorder %s28, %s44
      %p46 = scmp.eq.s32.totalorder %s20, 0
      %p47 = por %p45, %p46
      %s49 = sadd.s32 %s48, 1
      %p52 = scmp.eq.s32.totalorder %s14, 1
      %p53 = scmp.ne.s32.totalorder %s48, %s50
      %p54 = scmp.eq.s32.totalorder %s14, 0
      %p55 = por %p53, %p54
      %p56 = scmp.ne.s32.totalorder %s48, %s50
      %p57 = scmp.eq.s32.totalorder %s19, 1
      %p58 = por %p56, %p57
      %p59 = scmp.ne.s32.totalorder %s50, %s51
      %p60 = scmp.eq.s32.totalorder %s19, 0
      %p61 = por %p59, %p60
      %p62 = scmp.ne.s32.totalorder %s50, %s51
      %p63 = scmp.eq.s32.totalorder %s20, 1
      %p64 = por %p62, %p63
      %p66 = scmp.ne.s32.totalorder %s51, %s65
      %p67 = scmp.eq.s32.totalorder %s20, 0
      %p68 = por %p66, %p67
      %s70 = sadd.s32 %s69, 1
      %p73 = scmp.eq.s32.totalorder %s14, 1
      %p74 = scmp.ne.s32.totalorder %s69, %s71
      %p75 = scmp.eq.s32.totalorder %s14, 0
      %p76 = por %p74, %p75
      %p77 = scmp.ne.s32.totalorder %s69, %s71
      %p78 = scmp.eq.s32.totalorder %s19, 1
      %p79 = por %p77, %p78
      %p80 = scmp.ne.s32.totalorder %s71, %s72
      %p81 = scmp.eq.s32.totalorder %s19, 0
      %p82 = por %p80, %p81
      %p83 = scmp.ne.s32.totalorder %s71, %s72
      %p84 = scmp.eq.s32.totalorder %s20, 1
      %p85 = por %p83, %p84
      %p87 = scmp.ne.s32.totalorder %s72, %s86
      %p88 = scmp.eq.s32.totalorder %s20, 0
      %p89 = por %p87, %p88
      %s91 = sadd.s32 %s90, 1
      %p94 = scmp.eq.s32.totalorder %s14, 1
      %p95 = scmp.ne.s32.totalorder %s90, %s92
      %p96 = scmp.eq.s32.totalorder %s14, 0
      %p97 = por %p95, %p96
      %p98 = scmp.ne.s32.totalorder %s90, %s92
      %p99 = scmp.eq.s32.totalorder %s19, 1
      %p100 = por %p98, %p99
      %p101 = scmp.ne.s32.totalorder %s92, %s93
      %p102 = scmp.eq.s32.totalorder %s19, 0
      %p103 = por %p101, %p102
      %p104 = scmp.ne.s32.totalorder %s92, %s93
      %p105 = scmp.eq.s32.totalorder %s20, 1
      %p106 = por %p104, %p105
      %p108 = scmp.ne.s32.totalorder %s93, %s107
      %p109 = scmp.eq.s32.totalorder %s20, 0
      %p110 = por %p108, %p109
      %s112 = sadd.s32 %s111, 1
      %p115 = scmp.eq.s32.totalorder %s14, 1
      %p116 = scmp.ne.s32.totalorder %s111, %s113
      %p117 = scmp.eq.s32.totalorder %s14, 0
      %p118 = por %p116, %p117
      %p119 = scmp.ne.s32.totalorder %s111, %s113
      %p120 = scmp.eq.s32.totalorder %s19, 1
      %p121 = por %p119, %p120
      %p122 = scmp.ne.s32.totalorder %s113, %s114
      %p123 = scmp.eq.s32.totalorder %s19, 0
      %p124 = por %p122, %p123
      %p125 = scmp.ne.s32.totalorder %s113, %s114
      %p126 = scmp.eq.s32.totalorder %s20, 1
      %p127 = por %p125, %p126
      %p129 = scmp.ne.s32.totalorder %s114, %s128
      %p130 = scmp.eq.s32.totalorder %s20, 0
      %p131 = por %p129, %p130
      %s132 = ssub.s32 %s14, %s21
      %p133 = scmp.eq.s32.totalorder %s132, 0
      %s135 = sadd.s32 %s134, 1
      %s136 = scalar_select %p133, %s134, %s135
      %p139 = pneg %p133
      %p140 = scmp.eq.s32.totalorder %s14, 1
      %p141 = por %p139, %p140
      %p142 = scmp.ne.s32.totalorder %s134, %s137
      %p143 = scmp.eq.s32.totalorder %s14, 0
      %p144 = por %p142, %p143
      %p145 = scmp.ne.s32.totalorder %s134, %s137
      %p146 = scmp.eq.s32.totalorder %s19, 1
      %p147 = por %p145, %p146
      %p148 = scmp.ne.s32.totalorder %s137, %s138
      %p149 = scmp.eq.s32.totalorder %s19, 0
      %p150 = por %p148, %p149
      %p151 = scmp.ne.s32.totalorder %s137, %s138
      %p152 = scmp.eq.s32.totalorder %s20, 1
      %p153 = por %p151, %p152
      %p155 = scmp.ne.s32.totalorder %s138, %s154
      %p156 = scmp.eq.s32.totalorder %s20, 0
      %p157 = por %p155, %p156
      %p158 = scmp.le.s32.totalorder 1, %s14
      %p159 = scmp.lt.s32.totalorder %s14, 3
      %p160 = pnand %p158, %p159
      %p161 = pneg %p160
      // Predicated region
      $region9: #{tpu_custom_call.1} parent=5 // pred_check
        _
      $region10: #{tpu_custom_call.1} parent=5 // pred_check_branch
        %163 = sbr.rel (%p160) target = $region12
      $region11: #{tpu_custom_call.1} parent=5 // pred_region
        %s164 = ssub.s32 %s14, 1
        // Predicated region
        $region13: #{tpu_custom_call.1} parent=11 // pred_check
          %p165 = pneg %p61
        $region14: #{tpu_custom_call.1} parent=11 // pred_check_branch
          %167 = sbr.rel (%p165) target = $region16
        $region15: #{tpu_custom_call.1} parent=11 // pred_region
          _
        $region16: #{tpu_custom_call.1} parent=11 // pred_fallthru
          _
        // Predicated region
        $region17: #{tpu_custom_call.1} parent=11 // pred_check
          %p168 = pneg %p82
        $region18: #{tpu_custom_call.1} parent=11 // pred_check_branch
          %170 = sbr.rel (%p168) target = $region20
        $region19: #{tpu_custom_call.1} parent=11 // pred_region
          _
        $region20: #{tpu_custom_call.1} parent=11 // pred_fallthru
          _
        // Predicated region
        $region21: #{tpu_custom_call.1} parent=11 // pred_check
          %p171 = pneg %p103
        $region22: #{tpu_custom_call.1} parent=11 // pred_check_branch
          %173 = sbr.rel (%p171) target = $region24
        $region23: #{tpu_custom_call.1} parent=11 // pred_region
          _
        $region24: #{tpu_custom_call.1} parent=11 // pred_fallthru
          _
        // Predicated region
        $region25: #{tpu_custom_call.1} parent=11 // pred_check
          %p174 = pneg %p124
        $region26: #{tpu_custom_call.1} parent=11 // pred_check_branch
          %176 = sbr.rel (%p174) target = $region28
        $region27: #{tpu_custom_call.1} parent=11 // pred_region
          _
        $region28: #{tpu_custom_call.1} parent=11 // pred_fallthru
          _
      $region12: #{tpu_custom_call.1} parent=5 // pred_fallthru
        _
      %p177 = scmp.lt.s32.totalorder %s14, 2
      // Predicated region
      $region29: #{tpu_custom_call.1} parent=5 // pred_check
        %p178 = pneg %p177
      $region30: #{tpu_custom_call.1} parent=5 // pred_check_branch
        %180 = sbr.rel (%p178) target = $region32
      $region31: #{tpu_custom_call.1} parent=5 // pred_region
        // Predicated region
        $region33: #{tpu_custom_call.1} parent=31 // pred_check
          %p181 = pneg %p34
        $region34: #{tpu_custom_call.1} parent=31 // pred_check_branch
          %183 = sbr.rel (%p181) target = $region36
        $region35: #{tpu_custom_call.1} parent=31 // pred_region
          %s184 = smul.u32 4, %s14
          %p185 = scmp.lt.s32.totalorder %s184, 7
          %s186 = scalar_select %p185, %s184, 7
          %s187 = smul.addr %s186, 8
          %s188 = scalar_lea.vmem %s0, %s187
          %s189 = smul.u32 4, %s14
        $region36: #{tpu_custom_call.1} parent=31 // pred_fallthru
          _
      $region32: #{tpu_custom_call.1} parent=5 // pred_fallthru
        _
      %p190 = scmp.le.s32.totalorder 1, %s14
      %p191 = scmp.lt.s32.totalorder %s14, 3
      %p192 = pnand %p190, %p191
      %p193 = pneg %p192
      // Predicated region
      $region37: #{tpu_custom_call.1} parent=5 // pred_check
        _
      $region38: #{tpu_custom_call.1} parent=5 // pred_check_branch
        %195 = sbr.rel (%p192) target = $region40
      $region39: #{tpu_custom_call.1} parent=5 // pred_region
        %s196 = ssub.s32 %s14, 1
        %s197 = smul.u32 4, %s19
        %p198 = scmp.lt.s32.totalorder %s197, 7
        %s199 = scalar_select %p198, %s197, 7
        %s200 = smul.addr %s199, 8
        %s201 = scalar_lea.vmem %s0, %s200
        %p202 = pneg %p40
        %p203 = pneg %p37
        %p204 = pneg %p61
        %p205 = pneg %p58
        %p206 = pneg %p82
        %p207 = pneg %p79
        %p208 = pneg %p103
        %p209 = pneg %p100
        %p210 = pneg %p124
        %p211 = pneg %p121
        %p212 = pneg %p150
        %p213 = pneg %p147
        %s214 = sand.u32 %s137, 1
        %s215 = scalar_lea.sflag [#allocation3], %s214
        %s216 = sand.u32 %s137, 1
        %s217 = smul.addr %s216, 32
        %s218 = scalar_lea.vmem [#allocation2], %s217
        %s219 = smul.u32 4, %s19
        %p220 = scmp.lt.s32.totalorder %s219, 7
        %s221 = scalar_select %p220, %s219, 7
        %s222 = smul.addr %s221, 8
        %s223 = scalar_lea.vmem %s0, %s222
        %s224 = smul.u32 4, %s19
        %s225 = smul.u32 4, %s19
        %v227 = vld [vmem:[%s223] sm:$0xff]
        %v228 = vld [vmem:[%s223 + $0x8] sm:$0xff]
        %v229 = vld [vmem:[%s223 + $0x10] sm:$0xff]
        %v230 = vld [vmem:[%s223 + $0x18] sm:$0xff]
        %v231 = vpack.c.bf16 %v228, %v227
        %v232 = vpack.c.bf16 %v230, %v229
        %v233 = vld [vmem:[%s1] sm:$0xff]
        %v234 = vld [vmem:[%s1 + $0x8] sm:$0xff]
        %v235 = vld [vmem:[%s1 + $0x10] sm:$0xff]
        %v236 = vld [vmem:[%s1 + $0x18] sm:$0xff]
        %v241 = vunpack.c.l.b16 %v233
        %v242 = vunpack.c.h.b16 %v233
        %v243 = vunpack.c.l.b16 %v234
        %v244 = vunpack.c.h.b16 %v234
        %v245 = vunpack.c.l.b16 %v235
        %v246 = vunpack.c.h.b16 %v235
        %v247 = vunpack.c.l.b16 %v236
        %v248 = vunpack.c.h.b16 %v236
        %v249 = vpack.c.b16 %v243, %v241
        %v250 = vpack.c.b16 %v244, %v242
        %v251 = vpack.c.b16 %v247, %v245
        %v252 = vpack.c.b16 %v248, %v246
        %vm257 = vcmask 261120
        %v259 = vsel %vm257, %v231, 0
        %v262 = vsel %vm257, %v232, 0
        %264 = vmatprep.subr.bf16.mxu0 %v250
        %265 = vmatpush1.bf16.msra.mxu0 %v249
        %266 = vmatprep.subr.bf16.mxu0 %v252
        %267 = vmatpush1.bf16.msra.mxu0 %v251
        %268 = vmatprep.subr.bf16.mxu0 0
        %269 = vmatpush1.bf16.msra.mxu0 0
        %270 = vmatprep.subr.bf16.mxu0 0
        %271 = vmatpush1.bf16.msra.mxu0 0
        %272 = vmatprep.subr.bf16.mxu0 0
        %273 = vmatpush1.bf16.msra.mxu0 0
        %274 = vmatprep.subr.bf16.mxu0 0
        %275 = vmatpush1.bf16.msra.mxu0 0
        %276 = vmatprep.subr.bf16.mxu0 0
        %277 = vmatpush1.bf16.msra.mxu0 0
        %278 = vmatprep.subr.bf16.mxu0 0
        %279 = vmatpush1.bf16.msra.mxu0 0
        %280 = vmatprep.subr.bf16.mxu0 0
        %281 = vmatpush1.bf16.msra.mxu0 0
        %282 = vmatprep.subr.bf16.mxu0 0
        %283 = vmatpush1.bf16.msra.mxu0 0
        %284 = vmatprep.subr.bf16.mxu0 0
        %285 = vmatpush1.bf16.msra.mxu0 0
        %286 = vmatprep.subr.bf16.mxu0 0
        %287 = vmatpush1.bf16.msra.mxu0 0
        %288 = vmatprep.subr.bf16.mxu0 0
        %289 = vmatpush1.bf16.msra.mxu0 0
        %290 = vmatprep.subr.bf16.mxu0 0
        %291 = vmatpush1.bf16.msra.mxu0 0
        %292 = vmatprep.subr.bf16.mxu0 0
        %293 = vmatpush1.bf16.msra.mxu0 0
        %294 = vmatprep.subr.bf16.mxu0 0
        %295 = vmatpush1.bf16.msra.mxu0 0
        %296 = vmatprep.mubr.bf16.mxu0 0
        %297 = vmatmul.mubr.bf16.gmra.mrb[0].mxu0 %v259
        %v298 = vpop.f32.mrb[0].mxu0
        %v299 = vadd.f32 0.0, %v298
        %v300 = vpop.f32.mrb[0].mxu0
        %v301 = vadd.f32 0.0, %v300
        %v302 = vpop.f32.mrb[0].mxu0
        %v303 = vadd.f32 0.0, %v302
        %v304 = vpop.f32.mrb[0].mxu0
        %v305 = vadd.f32 0.0, %v304
        %306 = vmatprep.mubr.bf16.mxu0 0
        %307 = vmatmul.mubr.bf16.gmra.mrb[0].mxu0 %v262
        %v308 = vpop.f32.mrb[0].mxu0
        %v309 = vadd.f32 0.0, %v308
        %v310 = vpop.f32.mrb[0].mxu0
        %v311 = vadd.f32 0.0, %v310
        %v312 = vpop.f32.mrb[0].mxu0
        %v313 = vadd.f32 0.0, %v312
        %v314 = vpop.f32.mrb[0].mxu0
        %v315 = vadd.f32 0.0, %v314
        %316 = vdwg.mxu0
        %v317 = vld [vmem:[%s2] sm:$0x1]
        %v319 = vlaneseq
        %v320 = vshrl.u32 %v319, 7
        %v321 = vsub.s32 0, %v320
        %v322 = vrot.slane %v317, %v321
        %v324 = vadd.f32 %v299, %v322
        %v325 = vadd.f32 %v303, %v322
        %v326 = vadd.f32 %v309, %v322
        %v327 = vadd.f32 %v313, %v322
        %v328 = vmax.f32 %v324, 0.0
        %v329 = vmax.f32 %v325, 0.0
        %v330 = vmax.f32 %v326, 0.0
        %v331 = vmax.f32 %v327, 0.0
        %v332 = vpack.c.bf16 %v329, %v328
        %v333 = vpack.c.bf16 %v331, %v330
        %v334 = vld [vmem:[%s3] sm:$0xf]
        %v335 = vld [vmem:[%s3 + $0x4] sm:$0xf]
        %v336 = vld [vmem:[%s3 + $0x8] sm:$0xf]
        %v337 = vld [vmem:[%s3 + $0xc] sm:$0xf]
        %v338 = vld [vmem:[%s3 + $0x10] sm:$0xf]
        %v339 = vld [vmem:[%s3 + $0x14] sm:$0xf]
        %v340 = vld [vmem:[%s3 + $0x18] sm:$0xf]
        %v341 = vld [vmem:[%s3 + $0x1c] sm:$0xf]
        %v342 = vld [vmem:[%s3 + $0x20] sm:$0xf]
        %v343 = vld [vmem:[%s3 + $0x24] sm:$0xf]
        %v344 = vld [vmem:[%s3 + $0x28] sm:$0xf]
        %v345 = vld [vmem:[%s3 + $0x2c] sm:$0xf]
        %v346 = vld [vmem:[%s3 + $0x30] sm:$0xf]
        %v347 = vld [vmem:[%s3 + $0x34] sm:$0xf]
        %v348 = vld [vmem:[%s3 + $0x38] sm:$0xf]
        %v349 = vld [vmem:[%s3 + $0x3c] sm:$0xf]
        %v366 = vunpack.c.l.b16 %v334
        %v367 = vunpack.c.l.b16 %v335
        %v368 = vunpack.c.l.b16 %v336
        %v369 = vunpack.c.l.b16 %v337
        %v370 = vunpack.c.l.b16 %v338
        %v371 = vunpack.c.l.b16 %v339
        %v372 = vunpack.c.l.b16 %v340
        %v373 = vunpack.c.l.b16 %v341
        %v374 = vunpack.c.l.b16 %v342
        %v375 = vunpack.c.l.b16 %v343
        %v376 = vunpack.c.l.b16 %v344
        %v377 = vunpack.c.l.b16 %v345
        %v378 = vunpack.c.l.b16 %v346
        %v379 = vunpack.c.l.b16 %v347
        %v380 = vunpack.c.l.b16 %v348
        %v381 = vunpack.c.l.b16 %v349
        %v382 = vpack.c.b16 %v367, %v366
        %v383 = vpack.c.b16 %v369, %v368
        %v384 = vpack.c.b16 %v371, %v370
        %v385 = vpack.c.b16 %v373, %v372
        %v386 = vpack.c.b16 %v375, %v374
        %v387 = vpack.c.b16 %v377, %v376
        %v388 = vpack.c.b16 %v379, %v378
        %v389 = vpack.c.b16 %v381, %v380
        %398 = vmatprep.subr.bf16.mxu0 0
        %399 = vmatpush1.bf16.msra.mxu0 %v382
        %400 = vmatprep.subr.bf16.mxu0 0
        %401 = vmatpush1.bf16.msra.mxu0 %v383
        %402 = vmatprep.subr.bf16.mxu0 0
        %403 = vmatpush1.bf16.msra.mxu0 %v384
        %404 = vmatprep.subr.bf16.mxu0 0
        %405 = vmatpush1.bf16.msra.mxu0 %v385
        %406 = vmatprep.subr.bf16.mxu0 0
        %407 = vmatpush1.bf16.msra.mxu0 %v386
        %408 = vmatprep.subr.bf16.mxu0 0
        %409 = vmatpush1.bf16.msra.mxu0 %v387
        %410 = vmatprep.subr.bf16.mxu0 0
        %411 = vmatpush1.bf16.msra.mxu0 %v388
        %412 = vmatprep.subr.bf16.mxu0 0
        %413 = vmatpush1.bf16.msra.mxu0 %v389
        %414 = vmatprep.subr.bf16.mxu0 0
        %415 = vmatpush1.bf16.msra.mxu0 0
        %416 = vmatprep.subr.bf16.mxu0 0
        %417 = vmatpush1.bf16.msra.mxu0 0
        %418 = vmatprep.subr.bf16.mxu0 0
        %419 = vmatpush1.bf16.msra.mxu0 0
        %420 = vmatprep.subr.bf16.mxu0 0
        %421 = vmatpush1.bf16.msra.mxu0 0
        %422 = vmatprep.subr.bf16.mxu0 0
        %423 = vmatpush1.bf16.msra.mxu0 0
        %424 = vmatprep.subr.bf16.mxu0 0
        %425 = vmatpush1.bf16.msra.mxu0 0
        %426 = vmatprep.subr.bf16.mxu0 0
        %427 = vmatpush1.bf16.msra.mxu0 0
        %428 = vmatprep.subr.bf16.mxu0 0
        %429 = vmatpush1.bf16.msra.mxu0 0
        %430 = vmatprep.mubr.bf16.mxu0 0
        %431 = vmatmul.mubr.bf16.gmra.mrb[0].mxu0 %v332
        %v432 = vpop.f32.mrb[0].mxu0
        %v433 = vadd.f32 %v301, %v432
        %v434 = vpop.f32.mrb[0].mxu0
        %v435 = vpop.f32.mrb[0].mxu0
        %v436 = vadd.f32 %v305, %v435
        %v437 = vpop.f32.mrb[0].mxu0
        %438 = vmatprep.mubr.bf16.mxu0 0
        %439 = vmatmul.mubr.bf16.gmra.mrb[0].mxu0 %v333
        %v440 = vpop.f32.mrb[0].mxu0
        %v441 = vadd.f32 %v311, %v440
        %v442 = vpop.f32.mrb[0].mxu0
        %v443 = vpop.f32.mrb[0].mxu0
        %v444 = vadd.f32 %v315, %v443
        %v445 = vpop.f32.mrb[0].mxu0
        %446 = vdwg.mxu0
        %v447 = vld [vmem:[%s4] sm:$0x1]
        %v449 = vlaneseq
        %v450 = vshrl.u32 %v449, 7
        %v451 = vsub.s32 0, %v450
        %v452 = vrot.slane %v447, %v451
        %v454 = vadd.f32 %v433, %v452
        %v455 = vadd.f32 %v436, %v452
        %v456 = vadd.f32 %v441, %v452
        %v457 = vadd.f32 %v444, %v452
        %458 = vst [vmem:[%s218] sm:$0xff] %v454
        %459 = vst [vmem:[%s218 + $0x8] sm:$0xff] %v455
        %460 = vst [vmem:[%s218 + $0x10] sm:$0xff] %v456
        %461 = vst [vmem:[%s218 + $0x18] sm:$0xff] %v457
        %s462 = sand.u32 %s137, 1
        %s463 = scalar_lea.sflag [#allocation3], %s462
        %s464 = sand.u32 %s137, 1
        %s465 = smul.addr %s464, 32
        %s466 = scalar_lea.vmem [#allocation2], %s465
        // Predicated region
        $region41: #{tpu_custom_call.1} parent=39 // pred_check
          %p467 = pneg %p147
        $region42: #{tpu_custom_call.1} parent=39 // pred_check_branch
          %469 = sbr.rel (%p467) target = $region44
        $region43: #{tpu_custom_call.1} parent=39 // pred_region
          %s470 = smul.u32 4, %s19
          %s472 = ssub.s32 512, 512
          %473 = vsyncadd %s463, %s472
          %s474 = smul.addr %s470, 128
          %s475 = scalar_lea.hbm %s5, %s474
          %s476 = sshll.u32 %s466, 4
          %s477 = int_to_ptr.vmem [resolvable:$true] %s476
          %482 = dma.vmem_to_hbm [thread:$0]  %s477, 512, %s475, %s463, 128, 128, 8
        $region44: #{tpu_custom_call.1} parent=39 // pred_fallthru
          _
      $region40: #{tpu_custom_call.1} parent=5 // pred_fallthru
        _
      %p483 = scmp.le.s32.totalorder 2, %s14
      // Predicated region
      $region45: #{tpu_custom_call.1} parent=5 // pred_check
        %p484 = pneg %p483
      $region46: #{tpu_custom_call.1} parent=5 // pred_check_branch
        %486 = sbr.rel (%p484) target = $region48
      $region47: #{tpu_custom_call.1} parent=5 // pred_region
        %s487 = ssub.s32 %s14, 2
        // Predicated region
        $region49: #{tpu_custom_call.1} parent=47 // pred_check
          %p488 = pneg %p153
        $region50: #{tpu_custom_call.1} parent=47 // pred_check_branch
          %490 = sbr.rel (%p488) target = $region52
        $region51: #{tpu_custom_call.1} parent=47 // pred_region
          %s491 = sand.u32 %s138, 1
          %s492 = scalar_lea.sflag [#allocation3], %s491
          %s493 = sand.u32 %s138, 1
          %s494 = smul.addr %s493, 32
          %s495 = scalar_lea.vmem [#allocation2], %s494
          %496 = dma.done %s492, 512
        $region52: #{tpu_custom_call.1} parent=47 // pred_fallthru
          _
      $region48: #{tpu_custom_call.1} parent=5 // pred_fallthru
        _
    $region6: #{tpu_custom_call.1} parent=1 // loop_footer
      %s18 = sadd.s32 1, %s14
    $region7: #{tpu_custom_call.1} parent=1 // loop_footer_branch
      %13 = sbr.rel target = $region3
    $region8: #{tpu_custom_call.1} parent=1 // loop_exit
      _
    %497 = vsyncpa [#allocation3], 1
    %s498 = scalar_lea.sflag [#allocation3], 1
    %499 = vsyncpa %s498, 1

// kernel: tpu_custom_call.1
$region0: #{tpu_custom_call.1}
  #allocation0 [shape = 'u32[]', space=smem, size = 0x4, offset = 0x4, fixed_abs, tag = 'smem constant byte address 0x4 - core index']
  #allocation1 [shape = 'u32[144,128]{1,0:T(1,128)}', space=vmem, size = 0x12000, scoped, tag = 'internal scratch']
  %s0 = inlined_call_operand.vmem [shape: f32[64,32], index: 0, kind: input, shape index: {}]
  %s1 = inlined_call_operand.vmem [shape: bf16[32,256], index: 1, kind: input, shape index: {}]
  %s2 = inlined_call_operand.vmem [shape: f32[1,128], index: 2, kind: input, shape index: {}]
  %s3 = inlined_call_operand.vmem [shape: bf16[128,128], index: 3, kind: input, shape index: {}]
  %s4 = inlined_call_operand.vmem [shape: f32[1,128], index: 4, kind: input, shape index: {}]
  %s5 = inlined_call_operand.hbm [shape: f32[64,128], index: 5, kind: output, shape index: {}]
  %s6 = sld [smem:[#allocation0]]
  $region53: #{tpu_custom_call.1} parent=0
    _
  %s8 = ssub.s32 1, %s6
  %s9 = scalar_select 0, %s8, %s6
  $region1: #{tpu_custom_call.1} parent=0
    #allocation2 [shape = 'u8[32768]{0}', space=vmem, size = 0x8000, scoped, tag = 'output window, operand 0']
    #allocation3 [shape = 's32[2]{0}', space=sflag, size = 0x8, scoped, tag = 'scoped memory for tpu_custom_call.1']
    %10 = vsyncpa [#allocation3], 0
    %s11 = scalar_lea.sflag [#allocation3], 1
    %12 = vsyncpa %s11, 0
    loop: start=0, step=1, limit=4
    $region2: #{tpu_custom_call.1} parent=1 // loop_pre_header
      _
    $region3: #{tpu_custom_call.1} parent=1 // loop_header
      %s14 = sphi 0, %s18
      %p15 = scmp.ge.s32.totalorder %s14, 4
      %s24 = sphi 0, %s26
      %s27 = sphi 0, %s24
      %s28 = sphi 0, %s27
      %s44 = sphi 0, %s28
      %s48 = sphi 0, %s48
      %s50 = sphi 0, %s48
      %s51 = sphi 0, %s50
      %s65 = sphi 0, %s51
      %s69 = sphi 0, %s69
      %s71 = sphi 0, %s69
      %s72 = sphi 0, %s71
      %s86 = sphi 0, %s72
      %s90 = sphi 0, %s90
      %s92 = sphi 0, %s90
      %s93 = sphi 0, %s92
      %s107 = sphi 0, %s93
      %s111 = sphi 0, %s111
      %s113 = sphi 0, %s111
      %s114 = sphi 0, %s113
      %s128 = sphi 0, %s114
      %s134 = sphi 0, %s136
      %s137 = sphi 0, %s134
      %s138 = sphi 0, %s137
      %s154 = sphi 0, %s138
    $region4: #{tpu_custom_call.1} parent=1 // loop_header_branch
      %17 = sbr.rel (%p15) target = $region8
    $region5: #{tpu_custom_call.1} parent=1 // loop_body
      %s19 = ssub.s32 %s14, 1
      %s20 = ssub.s32 %s14, 2
      %s21 = sadd.s32 %s14, 1
      %s22 = ssub.s32 %s14, %s21
      %p23 = scmp.eq.s32.totalorder %s22, 0
      %s25 = sadd.s32 %s24, 1
      %s26 = scalar_select %p23, %s24, %s25
      %p29 = pneg %p23
      %p30 = scmp.eq.s32.totalorder %s14, 1
      %p31 = por %p29, %p30
      %p32 = scmp.ne.s32.totalorder %s24, %s27
      %p33 = scmp.eq.s32.totalorder %s14, 0
      %p34 = por %p32, %p33
      %p35 = scmp.ne.s32.totalorder %s24, %s27
      %p36 = scmp.eq.s32.totalorder %s19, 1
      %p37 = por %p35, %p36
      %p38 = scmp.ne.s32.totalorder %s27, %s28
      %p39 = scmp.eq.s32.totalorder %s19, 0
      %p40 = por %p38, %p39
      %p41 = scmp.ne.s32.totalorder %s27, %s28
      %p42 = scmp.eq.s32.totalorder %s20, 1
      %p43 = por %p41, %p42
      %p45 = scmp.ne.s32.totalorder %s28, %s44
      %p46 = scmp.eq.s32.totalorder %s20, 0
      %p47 = por %p45, %p46
      %s49 = sadd.s32 %s48, 1
      %p52 = scmp.eq.s32.totalorder %s14, 1
      %p53 = scmp.ne.s32.totalorder %s48, %s50
      %p54 = scmp.eq.s32.totalorder %s14, 0
      %p55 = por %p53, %p54
      %p56 = scmp.ne.s32.totalorder %s48, %s50
      %p57 = scmp.eq.s32.totalorder %s19, 1
      %p58 = por %p56, %p57
      %p59 = scmp.ne.s32.totalorder %s50, %s51
      %p60 = scmp.eq.s32.totalorder %s19, 0
      %p61 = por %p59, %p60
      %p62 = scmp.ne.s32.totalorder %s50, %s51
      %p63 = scmp.eq.s32.totalorder %s20, 1
      %p64 = por %p62, %p63
      %p66 = scmp.ne.s32.totalorder %s51, %s65
      %p67 = scmp.eq.s32.totalorder %s20, 0
      %p68 = por %p66, %p67
      %s70 = sadd.s32 %s69, 1
      %p73 = scmp.eq.s32.totalorder %s14, 1
      %p74 = scmp.ne.s32.totalorder %s69, %s71
      %p75 = scmp.eq.s32.totalorder %s14, 0
      %p76 = por %p74, %p75
      %p77 = scmp.ne.s32.totalorder %s69, %s71
      %p78 = scmp.eq.s32.totalorder %s19, 1
      %p79 = por %p77, %p78
      %p80 = scmp.ne.s32.totalorder %s71, %s72
      %p81 = scmp.eq.s32.totalorder %s19, 0
      %p82 = por %p80, %p81
      %p83 = scmp.ne.s32.totalorder %s71, %s72
      %p84 = scmp.eq.s32.totalorder %s20, 1
      %p85 = por %p83, %p84
      %p87 = scmp.ne.s32.totalorder %s72, %s86
      %p88 = scmp.eq.s32.totalorder %s20, 0
      %p89 = por %p87, %p88
      %s91 = sadd.s32 %s90, 1
      %p94 = scmp.eq.s32.totalorder %s14, 1
      %p95 = scmp.ne.s32.totalorder %s90, %s92
      %p96 = scmp.eq.s32.totalorder %s14, 0
      %p97 = por %p95, %p96
      %p98 = scmp.ne.s32.totalorder %s90, %s92
      %p99 = scmp.eq.s32.totalorder %s19, 1
      %p100 = por %p98, %p99
      %p101 = scmp.ne.s32.totalorder %s92, %s93
      %p102 = scmp.eq.s32.totalorder %s19, 0
      %p103 = por %p101, %p102
      %p104 = scmp.ne.s32.totalorder %s92, %s93
      %p105 = scmp.eq.s32.totalorder %s20, 1
      %p106 = por %p104, %p105
      %p108 = scmp.ne.s32.totalorder %s93, %s107
      %p109 = scmp.eq.s32.totalorder %s20, 0
      %p110 = por %p108, %p109
      %s112 = sadd.s32 %s111, 1
      %p115 = scmp.eq.s32.totalorder %s14, 1
      %p116 = scmp.ne.s32.totalorder %s111, %s113
      %p117 = scmp.eq.s32.totalorder %s14, 0
      %p118 = por %p116, %p117
      %p119 = scmp.ne.s32.totalorder %s111, %s113
      %p120 = scmp.eq.s32.totalorder %s19, 1
      %p121 = por %p119, %p120
      %p122 = scmp.ne.s32.totalorder %s113, %s114
      %p123 = scmp.eq.s32.totalorder %s19, 0
      %p124 = por %p122, %p123
      %p125 = scmp.ne.s32.totalorder %s113, %s114
      %p126 = scmp.eq.s32.totalorder %s20, 1
      %p127 = por %p125, %p126
      %p129 = scmp.ne.s32.totalorder %s114, %s128
      %p130 = scmp.eq.s32.totalorder %s20, 0
      %p131 = por %p129, %p130
      %s132 = ssub.s32 %s14, %s21
      %p133 = scmp.eq.s32.totalorder %s132, 0
      %s135 = sadd.s32 %s134, 1
      %s136 = scalar_select %p133, %s134, %s135
      %p139 = pneg %p133
      %p140 = scmp.eq.s32.totalorder %s14, 1
      %p141 = por %p139, %p140
      %p142 = scmp.ne.s32.totalorder %s134, %s137
      %p143 = scmp.eq.s32.totalorder %s14, 0
      %p144 = por %p142, %p143
      %p145 = scmp.ne.s32.totalorder %s134, %s137
      %p146 = scmp.eq.s32.totalorder %s19, 1
      %p147 = por %p145, %p146
      %p148 = scmp.ne.s32.totalorder %s137, %s138
      %p149 = scmp.eq.s32.totalorder %s19, 0
      %p150 = por %p148, %p149
      %p151 = scmp.ne.s32.totalorder %s137, %s138
      %p152 = scmp.eq.s32.totalorder %s20, 1
      %p153 = por %p151, %p152
      %p155 = scmp.ne.s32.totalorder %s138, %s154
      %p156 = scmp.eq.s32.totalorder %s20, 0
      %p157 = por %p155, %p156
      %p158 = scmp.le.s32.totalorder 1, %s14
      %p159 = scmp.lt.s32.totalorder %s14, 3
      %p160 = pnand %p158, %p159
      %p161 = pneg %p160
      // Predicated region
      $region9: #{tpu_custom_call.1} parent=5 // pred_check
        _
      $region10: #{tpu_custom_call.1} parent=5 // pred_check_branch
        %163 = sbr.rel (%p160) target = $region12
      $region11: #{tpu_custom_call.1} parent=5 // pred_region
        %s164 = ssub.s32 %s14, 1
        // Predicated region
        $region13: #{tpu_custom_call.1} parent=11 // pred_check
          %p165 = pneg %p61
        $region14: #{tpu_custom_call.1} parent=11 // pred_check_branch
          %167 = sbr.rel (%p165) target = $region16
        $region15: #{tpu_custom_call.1} parent=11 // pred_region
          _
        $region16: #{tpu_custom_call.1} parent=11 // pred_fallthru
          _
        // Predicated region
        $region17: #{tpu_custom_call.1} parent=11 // pred_check
          %p168 = pneg %p82
        $region18: #{tpu_custom_call.1} parent=11 // pred_check_branch
          %170 = sbr.rel (%p168) target = $region20
        $region19: #{tpu_custom_call.1} parent=11 // pred_region
          _
        $region20: #{tpu_custom_call.1} parent=11 // pred_fallthru
          _
        // Predicated region
        $region21: #{tpu_custom_call.1} parent=11 // pred_check
          %p171 = pneg %p103
        $region22: #{tpu_custom_call.1} parent=11 // pred_check_branch
          %173 = sbr.rel (%p171) target = $region24
        $region23: #{tpu_custom_call.1} parent=11 // pred_region
          _
        $region24: #{tpu_custom_call.1} parent=11 // pred_fallthru
          _
        // Predicated region
        $region25: #{tpu_custom_call.1} parent=11 // pred_check
          %p174 = pneg %p124
        $region26: #{tpu_custom_call.1} parent=11 // pred_check_branch
          %176 = sbr.rel (%p174) target = $region28
        $region27: #{tpu_custom_call.1} parent=11 // pred_region
          _
        $region28: #{tpu_custom_call.1} parent=11 // pred_fallthru
          _
      $region12: #{tpu_custom_call.1} parent=5 // pred_fallthru
        _
      %p177 = scmp.lt.s32.totalorder %s14, 2
      // Predicated region
      $region29: #{tpu_custom_call.1} parent=5 // pred_check
        %p178 = pneg %p177
      $region30: #{tpu_custom_call.1} parent=5 // pred_check_branch
        %180 = sbr.rel (%p178) target = $region32
      $region31: #{tpu_custom_call.1} parent=5 // pred_region
        // Predicated region
        $region33: #{tpu_custom_call.1} parent=31 // pred_check
          %p181 = pneg %p34
        $region34: #{tpu_custom_call.1} parent=31 // pred_check_branch
          %183 = sbr.rel (%p181) target = $region36
        $region35: #{tpu_custom_call.1} parent=31 // pred_region
          %s184 = smul.u32 4, %s14
          %p185 = scmp.lt.s32.totalorder %s184, 7
          %s186 = scalar_select %p185, %s184, 7
          %s187 = smul.addr %s186, 8
          %s188 = scalar_lea.vmem %s0, %s187
          %s189 = smul.u32 4, %s14
        $region36: #{tpu_custom_call.1} parent=31 // pred_fallthru
          _
      $region32: #{tpu_custom_call.1} parent=5 // pred_fallthru
        _
      %p190 = scmp.le.s32.totalorder 1, %s14
      %p191 = scmp.lt.s32.totalorder %s14, 3
      %p192 = pnand %p190, %p191
      %p193 = pneg %p192
      // Predicated region
      $region37: #{tpu_custom_call.1} parent=5 // pred_check
        _
      $region38: #{tpu_custom_call.1} parent=5 // pred_check_branch
        %195 = sbr.rel (%p192) target = $region40
      $region39: #{tpu_custom_call.1} parent=5 // pred_region
        %s196 = ssub.s32 %s14, 1
        %s197 = smul.u32 4, %s19
        %p198 = scmp.lt.s32.totalorder %s197, 7
        %s199 = scalar_select %p198, %s197, 7
        %s200 = smul.addr %s199, 8
        %s201 = scalar_lea.vmem %s0, %s200
        %p202 = pneg %p40
        %p203 = pneg %p37
        %p204 = pneg %p61
        %p205 = pneg %p58
        %p206 = pneg %p82
        %p207 = pneg %p79
        %p208 = pneg %p103
        %p209 = pneg %p100
        %p210 = pneg %p124
        %p211 = pneg %p121
        %p212 = pneg %p150
        %p213 = pneg %p147
        %s214 = sand.u32 %s137, 1
        %s215 = scalar_lea.sflag [#allocation3], %s214
        %s216 = sand.u32 %s137, 1
        %s217 = smul.addr %s216, 32
        %s218 = scalar_lea.vmem [#allocation2], %s217
        %s219 = smul.u32 4, %s19
        %p220 = scmp.lt.s32.totalorder %s219, 7
        %s221 = scalar_select %p220, %s219, 7
        %s222 = smul.addr %s221, 8
        %s223 = scalar_lea.vmem %s0, %s222
        %s224 = smul.u32 4, %s19
        %s225 = smul.u32 4, %s19
        %v227 = vld [vmem:[%s223] sm:$0xff]
        %v228 = vld [vmem:[%s223 + $0x8] sm:$0xff]
        %v229 = vld [vmem:[%s223 + $0x10] sm:$0xff]
        %v230 = vld [vmem:[%s223 + $0x18] sm:$0xff]
        %v231 = vpack.c.bf16 %v228, %v227
        %v232 = vpack.c.bf16 %v230, %v229
        %v233 = vld [vmem:[%s1] sm:$0xff]
        %v234 = vld [vmem:[%s1 + $0x8] sm:$0xff]
        %v235 = vld [vmem:[%s1 + $0x10] sm:$0xff]
        %v236 = vld [vmem:[%s1 + $0x18] sm:$0xff]
        %v241 = vunpack.c.l.b16 %v233
        %v242 = vunpack.c.h.b16 %v233
        %v243 = vunpack.c.l.b16 %v234
        %v244 = vunpack.c.h.b16 %v234
        %v245 = vunpack.c.l.b16 %v235
        %v246 = vunpack.c.h.b16 %v235
        %v247 = vunpack.c.l.b16 %v236
        %v248 = vunpack.c.h.b16 %v236
        %v249 = vpack.c.b16 %v243, %v241
        %v250 = vpack.c.b16 %v244, %v242
        %v251 = vpack.c.b16 %v247, %v245
        %v252 = vpack.c.b16 %v248, %v246
        %vm257 = vcmask 261120
        %v259 = vsel %vm257, %v231, 0
        %v262 = vsel %vm257, %v232, 0
        %264 = vmatprep.subr.bf16.mxu0 %v250
        %265 = vmatpush1.bf16.msra.mxu0 %v249
        %266 = vmatprep.subr.bf16.mxu0 %v252
        %267 = vmatpush1.bf16.msra.mxu0 %v251
        %268 = vmatprep.subr.bf16.mxu0 0
        %269 = vmatpush1.bf16.msra.mxu0 0
        %270 = vmatprep.subr.bf16.mxu0 0
        %271 = vmatpush1.bf16.msra.mxu0 0
        %272 = vmatprep.subr.bf16.mxu0 0
        %273 = vmatpush1.bf16.msra.mxu0 0
        %274 = vmatprep.subr.bf16.mxu0 0
        %275 = vmatpush1.bf16.msra.mxu0 0
        %276 = vmatprep.subr.bf16.mxu0 0
        %277 = vmatpush1.bf16.msra.mxu0 0
        %278 = vmatprep.subr.bf16.mxu0 0
        %279 = vmatpush1.bf16.msra.mxu0 0
        %280 = vmatprep.subr.bf16.mxu0 0
        %281 = vmatpush1.bf16.msra.mxu0 0
        %282 = vmatprep.subr.bf16.mxu0 0
        %283 = vmatpush1.bf16.msra.mxu0 0
        %284 = vmatprep.subr.bf16.mxu0 0
        %285 = vmatpush1.bf16.msra.mxu0 0
        %286 = vmatprep.subr.bf16.mxu0 0
        %287 = vmatpush1.bf16.msra.mxu0 0
        %288 = vmatprep.subr.bf16.mxu0 0
        %289 = vmatpush1.bf16.msra.mxu0 0
        %290 = vmatprep.subr.bf16.mxu0 0
        %291 = vmatpush1.bf16.msra.mxu0 0
        %292 = vmatprep.subr.bf16.mxu0 0
        %293 = vmatpush1.bf16.msra.mxu0 0
        %294 = vmatprep.subr.bf16.mxu0 0
        %295 = vmatpush1.bf16.msra.mxu0 0
        %296 = vmatprep.mubr.bf16.mxu0 0
        %297 = vmatmul.mubr.bf16.gmra.mrb[0].mxu0 %v259
        %v298 = vpop.f32.mrb[0].mxu0
        %v299 = vadd.f32 0.0, %v298
        %v300 = vpop.f32.mrb[0].mxu0
        %v301 = vadd.f32 0.0, %v300
        %v302 = vpop.f32.mrb[0].mxu0
        %v303 = vadd.f32 0.0, %v302
        %v304 = vpop.f32.mrb[0].mxu0
        %v305 = vadd.f32 0.0, %v304
        %306 = vmatprep.mubr.bf16.mxu0 0
        %307 = vmatmul.mubr.bf16.gmra.mrb[0].mxu0 %v262
        %v308 = vpop.f32.mrb[0].mxu0
        %v309 = vadd.f32 0.0, %v308
        %v310 = vpop.f32.mrb[0].mxu0
        %v311 = vadd.f32 0.0, %v310
        %v312 = vpop.f32.mrb[0].mxu0
        %v313 = vadd.f32 0.0, %v312
        %v314 = vpop.f32.mrb[0].mxu0
        %v315 = vadd.f32 0.0, %v314
        %316 = vdwg.mxu0
        %v317 = vld [vmem:[%s2] sm:$0x1]
        %v319 = vlaneseq
        %v320 = vshrl.u32 %v319, 7
        %v321 = vsub.s32 0, %v320
        %v322 = vrot.slane %v317, %v321
        %v324 = vadd.f32 %v299, %v322
        %v325 = vadd.f32 %v303, %v322
        %v326 = vadd.f32 %v309, %v322
        %v327 = vadd.f32 %v313, %v322
        %v328 = vmax.f32 %v324, 0.0
        %v329 = vmax.f32 %v325, 0.0
        %v330 = vmax.f32 %v326, 0.0
        %v331 = vmax.f32 %v327, 0.0
        %v332 = vpack.c.bf16 %v329, %v328
        %v333 = vpack.c.bf16 %v331, %v330
        %v334 = vld [vmem:[%s3] sm:$0xf]
        %v335 = vld [vmem:[%s3 + $0x4] sm:$0xf]
        %v336 = vld [vmem:[%s3 + $0x8] sm:$0xf]
        %v337 = vld [vmem:[%s3 + $0xc] sm:$0xf]
        %v338 = vld [vmem:[%s3 + $0x10] sm:$0xf]
        %v339 = vld [vmem:[%s3 + $0x14] sm:$0xf]
        %v340 = vld [vmem:[%s3 + $0x18] sm:$0xf]
        %v341 = vld [vmem:[%s3 + $0x1c] sm:$0xf]
        %v342 = vld [vmem:[%s3 + $0x20] sm:$0xf]
        %v343 = vld [vmem:[%s3 + $0x24] sm:$0xf]
        %v344 = vld [vmem:[%s3 + $0x28] sm:$0xf]
        %v345 = vld [vmem:[%s3 + $0x2c] sm:$0xf]
        %v346 = vld [vmem:[%s3 + $0x30] sm:$0xf]
        %v347 = vld [vmem:[%s3 + $0x34] sm:$0xf]
        %v348 = vld [vmem:[%s3 + $0x38] sm:$0xf]
        %v349 = vld [vmem:[%s3 + $0x3c] sm:$0xf]
        %v366 = vunpack.c.l.b16 %v334
        %v367 = vunpack.c.l.b16 %v335
        %v368 = vunpack.c.l.b16 %v336
        %v369 = vunpack.c.l.b16 %v337
        %v370 = vunpack.c.l.b16 %v338
        %v371 = vunpack.c.l.b16 %v339
        %v372 = vunpack.c.l.b16 %v340
        %v373 = vunpack.c.l.b16 %v341
        %v374 = vunpack.c.l.b16 %v342
        %v375 = vunpack.c.l.b16 %v343
        %v376 = vunpack.c.l.b16 %v344
        %v377 = vunpack.c.l.b16 %v345
        %v378 = vunpack.c.l.b16 %v346
        %v379 = vunpack.c.l.b16 %v347
        %v380 = vunpack.c.l.b16 %v348
        %v381 = vunpack.c.l.b16 %v349
        %v382 = vpack.c.b16 %v367, %v366
        %v383 = vpack.c.b16 %v369, %v368
        %v384 = vpack.c.b16 %v371, %v370
        %v385 = vpack.c.b16 %v373, %v372
        %v386 = vpack.c.b16 %v375, %v374
        %v387 = vpack.c.b16 %v377, %v376
        %v388 = vpack.c.b16 %v379, %v378
        %v389 = vpack.c.b16 %v381, %v380
        %398 = vmatprep.subr.bf16.mxu0 0
        %399 = vmatpush1.bf16.msra.mxu0 %v382
        %400 = vmatprep.subr.bf16.mxu0 0
        %401 = vmatpush1.bf16.msra.mxu0 %v383
        %402 = vmatprep.subr.bf16.mxu0 0
        %403 = vmatpush1.bf16.msra.mxu0 %v384
        %404 = vmatprep.subr.bf16.mxu0 0
        %405 = vmatpush1.bf16.msra.mxu0 %v385
        %406 = vmatprep.subr.bf16.mxu0 0
        %407 = vmatpush1.bf16.msra.mxu0 %v386
        %408 = vmatprep.subr.bf16.mxu0 0
        %409 = vmatpush1.bf16.msra.mxu0 %v387
        %410 = vmatprep.subr.bf16.mxu0 0
        %411 = vmatpush1.bf16.msra.mxu0 %v388
        %412 = vmatprep.subr.bf16.mxu0 0
        %413 = vmatpush1.bf16.msra.mxu0 %v389
        %414 = vmatprep.subr.bf16.mxu0 0
        %415 = vmatpush1.bf16.msra.mxu0 0
        %416 = vmatprep.subr.bf16.mxu0 0
        %417 = vmatpush1.bf16.msra.mxu0 0
        %418 = vmatprep.subr.bf16.mxu0 0
        %419 = vmatpush1.bf16.msra.mxu0 0
        %420 = vmatprep.subr.bf16.mxu0 0
        %421 = vmatpush1.bf16.msra.mxu0 0
        %422 = vmatprep.subr.bf16.mxu0 0
        %423 = vmatpush1.bf16.msra.mxu0 0
        %424 = vmatprep.subr.bf16.mxu0 0
        %425 = vmatpush1.bf16.msra.mxu0 0
        %426 = vmatprep.subr.bf16.mxu0 0
        %427 = vmatpush1.bf16.msra.mxu0 0
        %428 = vmatprep.subr.bf16.mxu0 0
        %429 = vmatpush1.bf16.msra.mxu0 0
        %430 = vmatprep.mubr.bf16.mxu0 0
        %431 = vmatmul.mubr.bf16.gmra.mrb[0].mxu0 %v332
        %v432 = vpop.f32.mrb[0].mxu0
        %v433 = vadd.f32 %v301, %v432
        %v434 = vpop.f32.mrb[0].mxu0
        %v435 = vpop.f32.mrb[0].mxu0
        %v436 = vadd.f32 %v305, %v435
        %v437 = vpop.f32.mrb[0].mxu0
        %438 = vmatprep.mubr.bf16.mxu0 0
        %439 = vmatmul.mubr.bf16.gmra.mrb[0].mxu0 %v333
        %v440 = vpop.f32.mrb[0].mxu0
        %v441 = vadd.f32 %v311, %v440
        %v442 = vpop.f32.mrb[0].mxu0
        %v443 = vpop.f32.mrb[0].mxu0
        %v444 = vadd.f32 %v315, %v443
        %v445 = vpop.f32.mrb[0].mxu0
        %446 = vdwg.mxu0
        %v447 = vld [vmem:[%s4] sm:$0x1]
        %v449 = vlaneseq
        %v450 = vshrl.u32 %v449, 7
        %v451 = vsub.s32 0, %v450
        %v452 = vrot.slane %v447, %v451
        %v454 = vadd.f32 %v433, %v452
        %v455 = vadd.f32 %v436, %v452
        %v456 = vadd.f32 %v441, %v452
        %v457 = vadd.f32 %v444, %v452
        %458 = vst [vmem:[%s218] sm:$0xff] %v454
        %459 = vst [vmem:[%s218 + $0x8] sm:$0xff] %v455
        %460 = vst [vmem:[%s218 + $0x10] sm:$0xff] %v456
        %461 = vst [vmem:[%s218 + $0x18] sm:$0xff] %v457
        %s462 = sand.u32 %s137, 1
        %s463 = scalar_lea.sflag [#allocation3], %s462
        %s464 = sand.u32 %s137, 1
        %s465 = smul.addr %s464, 32
        %s466 = scalar_lea.vmem [#allocation2], %s465
        // Predicated region
        $region41: #{tpu_custom_call.1} parent=39 // pred_check
          %p467 = pneg %p147
        $region42: #{tpu_custom_call.1} parent=39 // pred_check_branch
          %469 = sbr.rel (%p467) target = $region44
        $region43: #{tpu_custom_call.1} parent=39 // pred_region
          %s470 = smul.u32 4, %s19
          %s472 = ssub.s32 512, 512
          %473 = vsyncadd %s463, %s472
          %s474 = smul.addr %s470, 128
          %s475 = scalar_lea.hbm %s5, %s474
          %s476 = sshll.u32 %s466, 4
          %s477 = int_to_ptr.vmem [resolvable:$true] %s476
          %482 = dma.vmem_to_hbm [thread:$0]  %s477, 512, %s475, %s463, 128, 128, 8
        $region44: #{tpu_custom_call.1} parent=39 // pred_fallthru
          _
      $region40: #{tpu_custom_call.1} parent=5 // pred_fallthru
        _
      %p483 = scmp.le.s32.totalorder 2, %s14
      // Predicated region
      $region45: #{tpu_custom_call.1} parent=5 // pred_check
        %p484 = pneg %p483
      $region46: #{tpu_custom_call.1} parent=5 // pred_check_branch
        %486 = sbr.rel (%p484) target = $region48
      $region47: #{tpu_custom_call.1} parent=5 // pred_region
        %s487 = ssub.s32 %s14, 2
        // Predicated region
        $region49: #{tpu_custom_call.1} parent=47 // pred_check
          %p488 = pneg %p153
        $region50: #{tpu_custom_call.1} parent=47 // pred_check_branch
          %490 = sbr.rel (%p488) target = $region52
        $region51: #{tpu_custom_call.1} parent=47 // pred_region
          %s491 = sand.u32 %s138, 1
          %s492 = scalar_lea.sflag [#allocation3], %s491
          %s493 = sand.u32 %s138, 1
          %s494 = smul.addr %s493, 32
          %s495 = scalar_lea.vmem [#allocation2], %s494
          %496 = dma.done %s492, 512
        $region52: #{tpu_custom_call.1} parent=47 // pred_fallthru
          _
      $region48: #{tpu_custom_call.1} parent=5 // pred_fallthru
        _
    $region6: #{tpu_custom_call.1} parent=1 // loop_footer
      %s18 = sadd.s32 1, %s14
    $region7: #{tpu_custom_call.1} parent=1 // loop_footer_branch
      %13 = sbr.rel target = $region3
    $region8: #{tpu_custom_call.1} parent=1 // loop_exit
      _
    %497 = vsyncpa [#allocation3], 1
    %s498 = scalar_lea.sflag [#allocation3], 1
    %499 = vsyncpa %s498, 1

</llo_original>
